<compile_context>
chip_gen: v5e
topology: v5e:2x2
jax: 0.10.0
libtpu: 0.0.40
codegen_flags: <defaults>
</compile_context>

<pallas_src>
import functools

import jax
import jax.numpy as jnp
from jax.experimental import pallas as pl
from jax.experimental.pallas import tpu as pltpu

EPS = 0.0  # WGINConv default eps (train_eps=False)


def _round_up(x, m):
    return ((x + m - 1) // m) * m


# ---------------------------------------------------------------------------
# Fused Pallas kernel: all GIN layers + global_add_pool + concat readout
# ---------------------------------------------------------------------------
def fused_gin_kernel(x_ref, a_ref, p_ref, *args, num_layers, eps, dim_pad):
    """args = [w1_0, b1_0, w2_0, b2_0, ..., w1_{L-1}, b1_{L-1}, w2_{L-1}, b2_{L-1}, out_ref].

    For each layer l (static unroll; x stays on-chip across layers):
        agg = (1+eps)*x + A @ x
        x   = relu( relu(agg @ W1 + b1) @ W2 + b2 )
        out[:, l*Dp:(l+1)*Dp] = P @ x          (global add pool, lane-dense store)
    """
    *param_refs, out_ref = args

    # Hoisted: adjacency and pooling matrix are reused by every layer.
    a = a_ref[...]
    p = p_ref[...]
    x = x_ref[...]

    for l in range(num_layers):
        w1 = param_refs[4 * l + 0][...]
        b1 = param_refs[4 * l + 1][...]
        w2 = param_refs[4 * l + 2][...]
        b2 = param_refs[4 * l + 3][...]

        agg = (1.0 + eps) * x + jnp.dot(a, x, preferred_element_type=jnp.float32)
        h = jnp.maximum(
            jnp.dot(agg, w1, preferred_element_type=jnp.float32) + b1, 0.0
        )
        x = jnp.maximum(
            jnp.dot(h, w2, preferred_element_type=jnp.float32) + b2, 0.0
        )

        pooled = jnp.dot(p, x, preferred_element_type=jnp.float32)
        out_ref[:, l * dim_pad : (l + 1) * dim_pad] = pooled.astype(out_ref.dtype)


# ---------------------------------------------------------------------------
# Wrapper: pad to lane-dense shapes, single pallas_call, un-pad / readout
# ---------------------------------------------------------------------------
def _full_spec(shape):
    # Single grid step: whole (padded) array resident in VMEM, block == array.
    return pl.BlockSpec(shape, lambda: tuple(0 for _ in shape))


def gin_forward(x, adj, pool_mat, params, eps=EPS, readout="concat"):
    """params: list of (w1, b1, w2, b2) per layer. Returns [G, ...] graph embedding."""
    n, f = x.shape
    g = pool_mat.shape[0]
    num_layers = len(params)
    dim = params[0][2].shape[1]

    n_pad = _round_up(n, 128)   # lane-dense contraction dim for A @ x and P @ x
    f_pad = _round_up(f, 128)
    d_pad = _round_up(dim, 128)
    g_pad = _round_up(g, 8)

    f32 = jnp.float32
    x_p = jnp.zeros((n_pad, f_pad), f32).at[:n, :f].set(x.astype(f32))
    a_p = jnp.zeros((n_pad, n_pad), f32).at[:n, :n].set(adj.astype(f32))
    p_p = jnp.zeros((g_pad, n_pad), f32).at[:g, :n].set(pool_mat.astype(f32))

    flat_params = []
    in_specs = [_full_spec(x_p.shape), _full_spec(a_p.shape), _full_spec(p_p.shape)]
    for i, (w1, b1, w2, b2) in enumerate(params):
        in_d = f_pad if i == 0 else d_pad
        w1_p = jnp.zeros((in_d, d_pad), f32).at[: w1.shape[0], : w1.shape[1]].set(w1)
        b1_p = jnp.zeros((1, d_pad), f32).at[0, : b1.shape[0]].set(b1)
        w2_p = jnp.zeros((d_pad, d_pad), f32).at[: w2.shape[0], : w2.shape[1]].set(w2)
        b2_p = jnp.zeros((1, d_pad), f32).at[0, : b2.shape[0]].set(b2)
        for arr in (w1_p, b1_p, w2_p, b2_p):
            flat_params.append(arr)
            in_specs.append(_full_spec(arr.shape))

    out_cols = num_layers * d_pad
    kernel = functools.partial(
        fused_gin_kernel, num_layers=num_layers, eps=eps, dim_pad=d_pad
    )
    out_pad = pl.pallas_call(
        kernel,
        out_shape=jax.ShapeDtypeStruct((g_pad, out_cols), f32),
        in_specs=in_specs,
        out_specs=_full_spec((g_pad, out_cols)),
        compiler_params=pltpu.CompilerParams(vmem_limit_bytes=64 << 20),
    )(x_p, a_p, p_p, *flat_params)

    # Un-pad per-layer pooled blocks (cheap glue outside the kernel).
    pooled = [out_pad[:g, l * d_pad : l * d_pad + dim] for l in range(num_layers)]
    if readout == "concat":
        return jnp.concatenate(pooled, axis=1)
    elif readout == "last":
        return pooled[-1]
    elif readout == "add":
        acc = pooled[0]
        for t in pooled[1:]:
            acc = acc + t
        return acc
    raise ValueError(readout)


# ---------------------------------------------------------------------------
# Pure-JAX reference (for correctness check)
# ---------------------------------------------------------------------------
def gin_reference(x, adj, pool_mat, params, eps=EPS, readout="concat"):
    xs = []
    h = x
    for (w1, b1, w2, b2) in params:
        agg = (1.0 + eps) * h + adj @ h
        h = jax.nn.relu(jax.nn.relu(agg @ w1 + b1) @ w2 + b2)
        xs.append(h)
    pooled = [pool_mat @ h for h in xs]
    if readout == "concat":
        return jnp.concatenate(pooled, axis=1)
    elif readout == "last":
        return pooled[-1]
    elif readout == "add":
        return sum(pooled)
    raise ValueError(readout)


# ---------------------------------------------------------------------------
# Main
# ---------------------------------------------------------------------------
if __name__ == "__main__":
    key = jax.random.PRNGKey(0)

    # Small synthetic graph batch: 2 graphs of 8 nodes each (16 nodes total).
    N = 16               # total nodes
    NUM_FEATURES = 8
    DIM = 32
    NUM_LAYERS = 3
    G = 2                # number of graphs
    READOUT = "concat"   # pooling='add', readout='concat'

    k_x, k_w, k_ew = jax.random.split(key, 3)

    # Node features
    x = jax.random.normal(k_x, (N, NUM_FEATURES), dtype=jnp.float32)

    # Edges: bidirectional ring inside each graph of 8 nodes
    src_list, dst_list = [], []
    for gg in range(G):
        base = gg * 8
        for i in range(8):
            a_n, b_n = base + i, base + (i + 1) % 8
            src_list += [a_n, b_n]
            dst_list += [b_n, a_n]
    src = jnp.array(src_list, dtype=jnp.int32)
    dst = jnp.array(dst_list, dtype=jnp.int32)
    edge_weight = jax.random.uniform(k_ew, (src.shape[0],), dtype=jnp.float32)

    # Dense adjacency with A[dst, src] = edge_weight  (glue, plain JAX)
    adj = jnp.zeros((N, N), dtype=jnp.float32).at[dst, src].add(edge_weight)

    # batch vector -> one-hot pooling matrix P[g, n] (glue, plain JAX)
    batch = jnp.repeat(jnp.arange(G, dtype=jnp.int32), 8)
    pool_mat = (batch[None, :] == jnp.arange(G, dtype=jnp.int32)[:, None]).astype(
        jnp.float32
    )

    # Deterministic parameter init (MLP per layer: Linear -> ReLU -> Linear)
    params = []
    wkey = k_w
    for i in range(NUM_LAYERS):
        in_dim = NUM_FEATURES if i == 0 else DIM
        wkey, k1, k2, k3, k4 = jax.random.split(wkey, 5)
        w1 = jax.random.normal(k1, (in_dim, DIM), dtype=jnp.float32) / jnp.sqrt(in_dim)
        b1 = 0.01 * jax.random.normal(k2, (DIM,), dtype=jnp.float32)
        w2 = jax.random.normal(k3, (DIM, DIM), dtype=jnp.float32) / jnp.sqrt(DIM)
        b2 = 0.01 * jax.random.normal(k4, (DIM,), dtype=jnp.float32)
        params.append((w1, b1, w2, b2))

    graph_emb = gin_forward(x, adj, pool_mat, params, readout=READOUT)
    graph_emb = jax.block_until_ready(graph_emb)

    expected_cols = NUM_LAYERS * DIM if READOUT == "concat" else DIM
    assert graph_emb.shape == (G, expected_cols), graph_emb.shape
    assert bool(jnp.all(jnp.isfinite(graph_emb)))

    # Numerical check against a pure-JAX reference (tolerance covers MXU default precision).
    ref = gin_reference(x, adj, pool_mat, params, readout=READOUT)
    max_err = float(jnp.max(jnp.abs(graph_emb - ref)))
    scale = float(jnp.max(jnp.abs(ref))) + 1.0
    assert max_err <= 3e-2 * scale, (max_err, scale)

    print("KERNEL_OK")
</pallas_src>

<mosaic_0001>
module attributes {stable_mosaic.version = 11 : i64} {
  func.func @fused_gin_kernel(%arg0: memref<128x128xf32, #tpu.memory_space<vmem>>, %arg1: memref<128x128xf32, #tpu.memory_space<vmem>>, %arg2: memref<8x128xf32, #tpu.memory_space<vmem>>, %arg3: memref<128x128xf32, #tpu.memory_space<vmem>>, %arg4: memref<1x128xf32, #tpu.memory_space<vmem>>, %arg5: memref<128x128xf32, #tpu.memory_space<vmem>>, %arg6: memref<1x128xf32, #tpu.memory_space<vmem>>, %arg7: memref<128x128xf32, #tpu.memory_space<vmem>>, %arg8: memref<1x128xf32, #tpu.memory_space<vmem>>, %arg9: memref<128x128xf32, #tpu.memory_space<vmem>>, %arg10: memref<1x128xf32, #tpu.memory_space<vmem>>, %arg11: memref<128x128xf32, #tpu.memory_space<vmem>>, %arg12: memref<1x128xf32, #tpu.memory_space<vmem>>, %arg13: memref<128x128xf32, #tpu.memory_space<vmem>>, %arg14: memref<1x128xf32, #tpu.memory_space<vmem>>, %arg15: memref<8x384xf32, #tpu.memory_space<vmem>>) attributes {dimension_semantics = [], scalar_prefetch = 0 : i64, scratch_operands = 0 : i64, tpu.core_type = #tpu.core_type<tc>} {
    %c0 = arith.constant 0 : index
    %c0_0 = arith.constant 0 : index
    %0 = vector.load %arg1[%c0, %c0_0] : memref<128x128xf32, #tpu.memory_space<vmem>>, vector<128x128xf32>
    %c0_1 = arith.constant 0 : index
    %c0_2 = arith.constant 0 : index
    %1 = vector.load %arg2[%c0_1, %c0_2] : memref<8x128xf32, #tpu.memory_space<vmem>>, vector<8x128xf32>
    %c0_3 = arith.constant 0 : index
    %c0_4 = arith.constant 0 : index
    %2 = vector.load %arg0[%c0_3, %c0_4] : memref<128x128xf32, #tpu.memory_space<vmem>>, vector<128x128xf32>
    %c0_5 = arith.constant 0 : index
    %c0_6 = arith.constant 0 : index
    %3 = vector.load %arg3[%c0_5, %c0_6] : memref<128x128xf32, #tpu.memory_space<vmem>>, vector<128x128xf32>
    %c0_7 = arith.constant 0 : index
    %c0_8 = arith.constant 0 : index
    %4 = vector.load %arg4[%c0_7, %c0_8] : memref<1x128xf32, #tpu.memory_space<vmem>>, vector<1x128xf32>
    %c0_9 = arith.constant 0 : index
    %c0_10 = arith.constant 0 : index
    %5 = vector.load %arg5[%c0_9, %c0_10] : memref<128x128xf32, #tpu.memory_space<vmem>>, vector<128x128xf32>
    %c0_11 = arith.constant 0 : index
    %c0_12 = arith.constant 0 : index
    %6 = vector.load %arg6[%c0_11, %c0_12] : memref<1x128xf32, #tpu.memory_space<vmem>>, vector<1x128xf32>
    %cst = arith.constant 1.000000e+00 : f32
    %7 = vector.broadcast %cst : f32 to vector<128x128xf32>
    %8 = arith.mulf %7, %2 : vector<128x128xf32>
    %cst_13 = arith.constant dense<0.000000e+00> : vector<128x128xf32>
    %9 = tpu.matmul %0, %2, %cst_13 {dimension_numbers = #tpu.dot_dimension_numbers<[1], [0], [0], [1], [0, 0, 1, 1], [], []>} : vector<128x128xf32>, vector<128x128xf32>, vector<128x128xf32> -> vector<128x128xf32>
    %10 = arith.addf %8, %9 : vector<128x128xf32>
    %cst_14 = arith.constant dense<0.000000e+00> : vector<128x128xf32>
    %11 = tpu.matmul %10, %3, %cst_14 {dimension_numbers = #tpu.dot_dimension_numbers<[1], [0], [0], [1], [0, 0, 1, 1], [], []>} : vector<128x128xf32>, vector<128x128xf32>, vector<128x128xf32> -> vector<128x128xf32>
    %12 = vector.broadcast %4 : vector<1x128xf32> to vector<128x128xf32>
    %13 = arith.addf %11, %12 : vector<128x128xf32>
    %cst_15 = arith.constant 0.000000e+00 : f32
    %14 = vector.broadcast %cst_15 : f32 to vector<128x128xf32>
    %15 = arith.maximumf %13, %14 : vector<128x128xf32>
    %cst_16 = arith.constant dense<0.000000e+00> : vector<128x128xf32>
    %16 = tpu.matmul %15, %5, %cst_16 {dimension_numbers = #tpu.dot_dimension_numbers<[1], [0], [0], [1], [0, 0, 1, 1], [], []>} : vector<128x128xf32>, vector<128x128xf32>, vector<128x128xf32> -> vector<128x128xf32>
    %17 = vector.broadcast %6 : vector<1x128xf32> to vector<128x128xf32>
    %18 = arith.addf %16, %17 : vector<128x128xf32>
    %cst_17 = arith.constant 0.000000e+00 : f32
    %19 = vector.broadcast %cst_17 : f32 to vector<128x128xf32>
    %20 = arith.maximumf %18, %19 : vector<128x128xf32>
    %cst_18 = arith.constant dense<0.000000e+00> : vector<8x128xf32>
    %21 = tpu.matmul %1, %20, %cst_18 {dimension_numbers = #tpu.dot_dimension_numbers<[1], [0], [0], [1], [0, 0, 1, 1], [], []>} : vector<8x128xf32>, vector<128x128xf32>, vector<8x128xf32> -> vector<8x128xf32>
    %c0_19 = arith.constant 0 : index
    %c0_20 = arith.constant 0 : index
    %22 = vector.load %arg15[%c0_19, %c0_20] : memref<8x384xf32, #tpu.memory_space<vmem>>, vector<8x128xf32>
    tpu.vector_store %arg15[%c0_19, %c0_20], %21 {strides = array<i32>} : memref<8x384xf32, #tpu.memory_space<vmem>>, vector<8x128xf32>,
    %c0_21 = arith.constant 0 : index
    %c0_22 = arith.constant 0 : index
    %23 = vector.load %arg7[%c0_21, %c0_22] : memref<128x128xf32, #tpu.memory_space<vmem>>, vector<128x128xf32>
    %c0_23 = arith.constant 0 : index
    %c0_24 = arith.constant 0 : index
    %24 = vector.load %arg8[%c0_23, %c0_24] : memref<1x128xf32, #tpu.memory_space<vmem>>, vector<1x128xf32>
    %c0_25 = arith.constant 0 : index
    %c0_26 = arith.constant 0 : index
    %25 = vector.load %arg9[%c0_25, %c0_26] : memref<128x128xf32, #tpu.memory_space<vmem>>, vector<128x128xf32>
    %c0_27 = arith.constant 0 : index
    %c0_28 = arith.constant 0 : index
    %26 = vector.load %arg10[%c0_27, %c0_28] : memref<1x128xf32, #tpu.memory_space<vmem>>, vector<1x128xf32>
    %cst_29 = arith.constant 1.000000e+00 : f32
    %27 = vector.broadcast %cst_29 : f32 to vector<128x128xf32>
    %28 = arith.mulf %27, %20 : vector<128x128xf32>
    %cst_30 = arith.constant dense<0.000000e+00> : vector<128x128xf32>
    %29 = tpu.matmul %0, %20, %cst_30 {dimension_numbers = #tpu.dot_dimension_numbers<[1], [0], [0], [1], [0, 0, 1, 1], [], []>} : vector<128x128xf32>, vector<128x128xf32>, vector<128x128xf32> -> vector<128x128xf32>
    %30 = arith.addf %28, %29 : vector<128x128xf32>
    %cst_31 = arith.constant dense<0.000000e+00> : vector<128x128xf32>
    %31 = tpu.matmul %30, %23, %cst_31 {dimension_numbers = #tpu.dot_dimension_numbers<[1], [0], [0], [1], [0, 0, 1, 1], [], []>} : vector<128x128xf32>, vector<128x128xf32>, vector<128x128xf32> -> vector<128x128xf32>
    %32 = vector.broadcast %24 : vector<1x128xf32> to vector<128x128xf32>
    %33 = arith.addf %31, %32 : vector<128x128xf32>
    %cst_32 = arith.constant 0.000000e+00 : f32
    %34 = vector.broadcast %cst_32 : f32 to vector<128x128xf32>
    %35 = arith.maximumf %33, %34 : vector<128x128xf32>
    %cst_33 = arith.constant dense<0.000000e+00> : vector<128x128xf32>
    %36 = tpu.matmul %35, %25, %cst_33 {dimension_numbers = #tpu.dot_dimension_numbers<[1], [0], [0], [1], [0, 0, 1, 1], [], []>} : vector<128x128xf32>, vector<128x128xf32>, vector<128x128xf32> -> vector<128x128xf32>
    %37 = vector.broadcast %26 : vector<1x128xf32> to vector<128x128xf32>
    %38 = arith.addf %36, %37 : vector<128x128xf32>
    %cst_34 = arith.constant 0.000000e+00 : f32
    %39 = vector.broadcast %cst_34 : f32 to vector<128x128xf32>
    %40 = arith.maximumf %38, %39 : vector<128x128xf32>
    %cst_35 = arith.constant dense<0.000000e+00> : vector<8x128xf32>
    %41 = tpu.matmul %1, %40, %cst_35 {dimension_numbers = #tpu.dot_dimension_numbers<[1], [0], [0], [1], [0, 0, 1, 1], [], []>} : vector<8x128xf32>, vector<128x128xf32>, vector<8x128xf32> -> vector<8x128xf32>
    %c0_36 = arith.constant 0 : index
    %c128 = arith.constant 128 : index
    %42 = vector.load %arg15[%c0_36, %c128] : memref<8x384xf32, #tpu.memory_space<vmem>>, vector<8x128xf32>
    tpu.vector_store %arg15[%c0_36, %c128], %41 {strides = array<i32>} : memref<8x384xf32, #tpu.memory_space<vmem>>, vector<8x128xf32>,
    %c0_37 = arith.constant 0 : index
    %c0_38 = arith.constant 0 : index
    %43 = vector.load %arg11[%c0_37, %c0_38] : memref<128x128xf32, #tpu.memory_space<vmem>>, vector<128x128xf32>
    %c0_39 = arith.constant 0 : index
    %c0_40 = arith.constant 0 : index
    %44 = vector.load %arg12[%c0_39, %c0_40] : memref<1x128xf32, #tpu.memory_space<vmem>>, vector<1x128xf32>
    %c0_41 = arith.constant 0 : index
    %c0_42 = arith.constant 0 : index
    %45 = vector.load %arg13[%c0_41, %c0_42] : memref<128x128xf32, #tpu.memory_space<vmem>>, vector<128x128xf32>
    %c0_43 = arith.constant 0 : index
    %c0_44 = arith.constant 0 : index
    %46 = vector.load %arg14[%c0_43, %c0_44] : memref<1x128xf32, #tpu.memory_space<vmem>>, vector<1x128xf32>
    %cst_45 = arith.constant 1.000000e+00 : f32
    %47 = vector.broadcast %cst_45 : f32 to vector<128x128xf32>
    %48 = arith.mulf %47, %40 : vector<128x128xf32>
    %cst_46 = arith.constant dense<0.000000e+00> : vector<128x128xf32>
    %49 = tpu.matmul %0, %40, %cst_46 {dimension_numbers = #tpu.dot_dimension_numbers<[1], [0], [0], [1], [0, 0, 1, 1], [], []>} : vector<128x128xf32>, vector<128x128xf32>, vector<128x128xf32> -> vector<128x128xf32>
    %50 = arith.addf %48, %49 : vector<128x128xf32>
    %cst_47 = arith.constant dense<0.000000e+00> : vector<128x128xf32>
    %51 = tpu.matmul %50, %43, %cst_47 {dimension_numbers = #tpu.dot_dimension_numbers<[1], [0], [0], [1], [0, 0, 1, 1], [], []>} : vector<128x128xf32>, vector<128x128xf32>, vector<128x128xf32> -> vector<128x128xf32>
    %52 = vector.broadcast %44 : vector<1x128xf32> to vector<128x128xf32>
    %53 = arith.addf %51, %52 : vector<128x128xf32>
    %cst_48 = arith.constant 0.000000e+00 : f32
    %54 = vector.broadcast %cst_48 : f32 to vector<128x128xf32>
    %55 = arith.maximumf %53, %54 : vector<128x128xf32>
    %cst_49 = arith.constant dense<0.000000e+00> : vector<128x128xf32>
    %56 = tpu.matmul %55, %45, %cst_49 {dimension_numbers = #tpu.dot_dimension_numbers<[1], [0], [0], [1], [0, 0, 1, 1], [], []>} : vector<128x128xf32>, vector<128x128xf32>, vector<128x128xf32> -> vector<128x128xf32>
    %57 = vector.broadcast %46 : vector<1x128xf32> to vector<128x128xf32>
    %58 = arith.addf %56, %57 : vector<128x128xf32>
    %cst_50 = arith.constant 0.000000e+00 : f32
    %59 = vector.broadcast %cst_50 : f32 to vector<128x128xf32>
    %60 = arith.maximumf %58, %59 : vector<128x128xf32>
    %cst_51 = arith.constant dense<0.000000e+00> : vector<8x128xf32>
    %61 = tpu.matmul %1, %60, %cst_51 {dimension_numbers = #tpu.dot_dimension_numbers<[1], [0], [0], [1], [0, 0, 1, 1], [], []>} : vector<8x128xf32>, vector<128x128xf32>, vector<8x128xf32> -> vector<8x128xf32>
    %c0_52 = arith.constant 0 : index
    %c256 = arith.constant 256 : index
    %62 = vector.load %arg15[%c0_52, %c256] : memref<8x384xf32, #tpu.memory_space<vmem>>, vector<8x128xf32>
    tpu.vector_store %arg15[%c0_52, %c256], %61 {strides = array<i32>} : memref<8x384xf32, #tpu.memory_space<vmem>>, vector<8x128xf32>,
    return
  }
}

</mosaic_0001>

<llo_original>
// kernel: tpu_custom_call.1
$region0: #{tpu_custom_call.1}
  #allocation0 [shape = 'u32[]', space=smem, size = 0x4, offset = 0x4, fixed_abs, tag = 'smem constant byte address 0x4 - core index']
  #allocation1 [shape = 'u32[72,128]{1,0:T(1,128)}', space=vmem, size = 0x9000, scoped, tag = 'internal scratch']
  %s0 = inlined_call_operand.hbm [shape: f32[128,128], index: 0, kind: input, shape index: {}]
  %s1 = inlined_call_operand.hbm [shape: f32[128,128], index: 1, kind: input, shape index: {}]
  %s2 = inlined_call_operand.hbm [shape: f32[8,128], index: 2, kind: input, shape index: {}]
  %s3 = inlined_call_operand.hbm [shape: f32[128,128], index: 3, kind: input, shape index: {}]
  %s4 = inlined_call_operand.vmem [shape: f32[1,128], index: 4, kind: input, shape index: {}]
  %s5 = inlined_call_operand.hbm [shape: f32[128,128], index: 5, kind: input, shape index: {}]
  %s6 = inlined_call_operand.vmem [shape: f32[1,128], index: 6, kind: input, shape index: {}]
  %s7 = inlined_call_operand.hbm [shape: f32[128,128], index: 7, kind: input, shape index: {}]
  %s8 = inlined_call_operand.vmem [shape: f32[1,128], index: 8, kind: input, shape index: {}]
  %s9 = inlined_call_operand.hbm [shape: f32[128,128], index: 9, kind: input, shape index: {}]
  %s10 = inlined_call_operand.vmem [shape: f32[1,128], index: 10, kind: input, shape index: {}]
  %s11 = inlined_call_operand.hbm [shape: f32[128,128], index: 11, kind: input, shape index: {}]
  %s12 = inlined_call_operand.vmem [shape: f32[1,128], index: 12, kind: input, shape index: {}]
  %s13 = inlined_call_operand.hbm [shape: f32[128,128], index: 13, kind: input, shape index: {}]
  %s14 = inlined_call_operand.vmem [shape: f32[1,128], index: 14, kind: input, shape index: {}]
  %s15 = inlined_call_operand.hbm [shape: f32[8,384], index: 15, kind: output, shape index: {}]
  %s16 = sld [smem:[#allocation0]]
  $region106: #{tpu_custom_call.1} parent=0
    _
  %s18 = ssub.s32 1, %s16
  %s19 = scalar_select 0, %s18, %s16
  $region1: #{tpu_custom_call.1} parent=0
    #allocation2 [shape = 'u8[65536]{0}', space=vmem, size = 0x10000, scoped, tag = 'input window, operand 0, single buffered']
    #allocation3 [shape = 's32[1]{0}', space=sflag, size = 0x4, scoped, tag = 'scoped memory for tpu_custom_call.1']
    #allocation4 [shape = 's32[1]{0}', space=sflag, size = 0x4, scoped, tag = 'scoped memory for tpu_custom_call.1']
    #allocation5 [shape = 'u8[65536]{0}', space=vmem, size = 0x10000, scoped, tag = 'input window, operand 1, single buffered']
    #allocation6 [shape = 's32[1]{0}', space=sflag, size = 0x4, scoped, tag = 'scoped memory for tpu_custom_call.1']
    #allocation7 [shape = 'u8[4096]{0}', space=vmem, size = 0x1000, scoped, tag = 'input window, operand 2, single buffered']
    #allocation8 [shape = 'u8[65536]{0}', space=vmem, size = 0x10000, scoped, tag = 'input window, operand 3, single buffered']
    #allocation9 [shape = 's32[1]{0}', space=sflag, size = 0x4, scoped, tag = 'scoped memory for tpu_custom_call.1']
    #allocation10 [shape = 'u8[65536]{0}', space=vmem, size = 0x10000, scoped, tag = 'input window, operand 5, single buffered']
    #allocation11 [shape = 'u8[65536]{0}', space=vmem, size = 0x10000, scoped, tag = 'input window, operand 7, single buffered']
    #allocation12 [shape = 's32[1]{0}', space=sflag, size = 0x4, scoped, tag = 'scoped memory for tpu_custom_call.1']
    #allocation13 [shape = 'u8[65536]{0}', space=vmem, size = 0x10000, scoped, tag = 'input window, operand 9, single buffered']
    #allocation14 [shape = 'u8[65536]{0}', space=vmem, size = 0x10000, scoped, tag = 'input window, operand 11, single buffered']
    #allocation15 [shape = 's32[1]{0}', space=sflag, size = 0x4, scoped, tag = 'scoped memory for tpu_custom_call.1']
    #allocation16 [shape = 'u8[65536]{0}', space=vmem, size = 0x10000, scoped, tag = 'input window, operand 13, single buffered']
    #allocation17 [shape = 'u8[12288]{0}', space=vmem, size = 0x3000, scoped, tag = 'output window, operand 0, single buffered']
    %20 = vsyncpa [#allocation3], 0
    %21 = vsyncpa [#allocation6], 0
    %22 = vsyncpa [#allocation9], 0
    %23 = vsyncpa [#allocation12], 0
    %24 = vsyncpa [#allocation15], 0
    %25 = vsyncpa [#allocation4], 0
    // Predicated region
    $region2: #{tpu_custom_call.1} parent=1 // pred_check
      _
    $region3: #{tpu_custom_call.1} parent=1 // pred_check_branch
      %27 = sbr.rel (0) target = $region5
    $region4: #{tpu_custom_call.1} parent=1 // pred_region
      %29 = vsyncadd [#allocation3], 0
      %s30 = sshll.u32 %s0, 4
      %s31 = int_to_ptr.hbm [resolvable:$true] %s30
      %s32 = sshll.u32 [#allocation2], 4
      %s33 = int_to_ptr.vmem [resolvable:$true] %s32
      %38 = dma.hbm_to_vmem [thread:$0]  %s31, 2048, %s33, [#allocation3], 128, 128, 8
    $region5: #{tpu_custom_call.1} parent=1 // pred_fallthru
      _
    // Predicated region
    $region6: #{tpu_custom_call.1} parent=1 // pred_check
      _
    $region7: #{tpu_custom_call.1} parent=1 // pred_check_branch
      %40 = sbr.rel (0) target = $region9
    $region8: #{tpu_custom_call.1} parent=1 // pred_region
      %42 = vsyncadd [#allocation6], 0
      %s43 = sshll.u32 %s1, 4
      %s44 = int_to_ptr.hbm [resolvable:$true] %s43
      %s45 = sshll.u32 [#allocation5], 4
      %s46 = int_to_ptr.vmem [resolvable:$true] %s45
      %51 = dma.hbm_to_vmem [thread:$0]  %s44, 2048, %s46, [#allocation6], 128, 128, 8
    $region9: #{tpu_custom_call.1} parent=1 // pred_fallthru
      _
    // Predicated region
    $region10: #{tpu_custom_call.1} parent=1 // pred_check
      _
    $region11: #{tpu_custom_call.1} parent=1 // pred_check_branch
      %53 = sbr.rel (0) target = $region13
    $region12: #{tpu_custom_call.1} parent=1 // pred_region
      %55 = vsyncadd [#allocation6], 0
      %s57 = sshll.u32 %s2, 4
      %s58 = int_to_ptr.hbm [resolvable:$true] %s57
      %s59 = sshll.u32 [#allocation7], 4
      %s60 = int_to_ptr.vmem [resolvable:$true] %s59
      %62 = dma.hbm_to_vmem [thread:$0]  %s58, 128, %s60, [#allocation6]
    $region13: #{tpu_custom_call.1} parent=1 // pred_fallthru
      _
    // Predicated region
    $region14: #{tpu_custom_call.1} parent=1 // pred_check
      _
    $region15: #{tpu_custom_call.1} parent=1 // pred_check_branch
      %64 = sbr.rel (0) target = $region17
    $region16: #{tpu_custom_call.1} parent=1 // pred_region
      %66 = vsyncadd [#allocation9], 0
      %s67 = sshll.u32 %s3, 4
      %s68 = int_to_ptr.hbm [resolvable:$true] %s67
      %s69 = sshll.u32 [#allocation8], 4
      %s70 = int_to_ptr.vmem [resolvable:$true] %s69
      %75 = dma.hbm_to_vmem [thread:$0]  %s68, 2048, %s70, [#allocation9], 128, 128, 8
    $region17: #{tpu_custom_call.1} parent=1 // pred_fallthru
      _
    // Predicated region
    $region18: #{tpu_custom_call.1} parent=1 // pred_check
      _
    $region19: #{tpu_custom_call.1} parent=1 // pred_check_branch
      %77 = sbr.rel (0) target = $region21
    $region20: #{tpu_custom_call.1} parent=1 // pred_region
      _
    $region21: #{tpu_custom_call.1} parent=1 // pred_fallthru
      _
    // Predicated region
    $region22: #{tpu_custom_call.1} parent=1 // pred_check
      _
    $region23: #{tpu_custom_call.1} parent=1 // pred_check_branch
      %79 = sbr.rel (0) target = $region25
    $region24: #{tpu_custom_call.1} parent=1 // pred_region
      %81 = vsyncadd [#allocation9], 0
      %s82 = sshll.u32 %s5, 4
      %s83 = int_to_ptr.hbm [resolvable:$true] %s82
      %s84 = sshll.u32 [#allocation10], 4
      %s85 = int_to_ptr.vmem [resolvable:$true] %s84
      %90 = dma.hbm_to_vmem [thread:$0]  %s83, 2048, %s85, [#allocation9], 128, 128, 8
    $region25: #{tpu_custom_call.1} parent=1 // pred_fallthru
      _
    // Predicated region
    $region26: #{tpu_custom_call.1} parent=1 // pred_check
      _
    $region27: #{tpu_custom_call.1} parent=1 // pred_check_branch
      %92 = sbr.rel (0) target = $region29
    $region28: #{tpu_custom_call.1} parent=1 // pred_region
      _
    $region29: #{tpu_custom_call.1} parent=1 // pred_fallthru
      _
    // Predicated region
    $region30: #{tpu_custom_call.1} parent=1 // pred_check
      _
    $region31: #{tpu_custom_call.1} parent=1 // pred_check_branch
      %94 = sbr.rel (0) target = $region33
    $region32: #{tpu_custom_call.1} parent=1 // pred_region
      %96 = vsyncadd [#allocation12], 0
      %s97 = sshll.u32 %s7, 4
      %s98 = int_to_ptr.hbm [resolvable:$true] %s97
      %s99 = sshll.u32 [#allocation11], 4
      %s100 = int_to_ptr.vmem [resolvable:$true] %s99
      %105 = dma.hbm_to_vmem [thread:$0]  %s98, 2048, %s100, [#allocation12], 128, 128, 8
    $region33: #{tpu_custom_call.1} parent=1 // pred_fallthru
      _
    // Predicated region
    $region34: #{tpu_custom_call.1} parent=1 // pred_check
      _
    $region35: #{tpu_custom_call.1} parent=1 // pred_check_branch
      %107 = sbr.rel (0) target = $region37
    $region36: #{tpu_custom_call.1} parent=1 // pred_region
      _
    $region37: #{tpu_custom_call.1} parent=1 // pred_fallthru
      _
    // Predicated region
    $region38: #{tpu_custom_call.1} parent=1 // pred_check
      _
    $region39: #{tpu_custom_call.1} parent=1 // pred_check_branch
      %109 = sbr.rel (0) target = $region41
    $region40: #{tpu_custom_call.1} parent=1 // pred_region
      %111 = vsyncadd [#allocation12], 0
      %s112 = sshll.u32 %s9, 4
      %s113 = int_to_ptr.hbm [resolvable:$true] %s112
      %s114 = sshll.u32 [#allocation13], 4
      %s115 = int_to_ptr.vmem [resolvable:$true] %s114
      %120 = dma.hbm_to_vmem [thread:$0]  %s113, 2048, %s115, [#allocation12], 128, 128, 8
    $region41: #{tpu_custom_call.1} parent=1 // pred_fallthru
      _
    // Predicated region
    $region42: #{tpu_custom_call.1} parent=1 // pred_check
      _
    $region43: #{tpu_custom_call.1} parent=1 // pred_check_branch
      %122 = sbr.rel (0) target = $region45
    $region44: #{tpu_custom_call.1} parent=1 // pred_region
      _
    $region45: #{tpu_custom_call.1} parent=1 // pred_fallthru
      _
    // Predicated region
    $region46: #{tpu_custom_call.1} parent=1 // pred_check
      _
    $region47: #{tpu_custom_call.1} parent=1 // pred_check_branch
      %124 = sbr.rel (0) target = $region49
    $region48: #{tpu_custom_call.1} parent=1 // pred_region
      %126 = vsyncadd [#allocation15], 0
      %s127 = sshll.u32 %s11, 4
      %s128 = int_to_ptr.hbm [resolvable:$true] %s127
      %s129 = sshll.u32 [#allocation14], 4
      %s130 = int_to_ptr.vmem [resolvable:$true] %s129
      %135 = dma.hbm_to_vmem [thread:$0]  %s128, 2048, %s130, [#allocation15], 128, 128, 8
    $region49: #{tpu_custom_call.1} parent=1 // pred_fallthru
      _
    // Predicated region
    $region50: #{tpu_custom_call.1} parent=1 // pred_check
      _
    $region51: #{tpu_custom_call.1} parent=1 // pred_check_branch
      %137 = sbr.rel (0) target = $region53
    $region52: #{tpu_custom_call.1} parent=1 // pred_region
      _
    $region53: #{tpu_custom_call.1} parent=1 // pred_fallthru
      _
    // Predicated region
    $region54: #{tpu_custom_call.1} parent=1 // pred_check
      _
    $region55: #{tpu_custom_call.1} parent=1 // pred_check_branch
      %139 = sbr.rel (0) target = $region57
    $region56: #{tpu_custom_call.1} parent=1 // pred_region
      %141 = vsyncadd [#allocation15], 0
      %s142 = sshll.u32 %s13, 4
      %s143 = int_to_ptr.hbm [resolvable:$true] %s142
      %s144 = sshll.u32 [#allocation16], 4
      %s145 = int_to_ptr.vmem [resolvable:$true] %s144
      %150 = dma.hbm_to_vmem [thread:$0]  %s143, 2048, %s145, [#allocation15], 128, 128, 8
    $region57: #{tpu_custom_call.1} parent=1 // pred_fallthru
      _
    // Predicated region
    $region58: #{tpu_custom_call.1} parent=1 // pred_check
      _
    $region59: #{tpu_custom_call.1} parent=1 // pred_check_branch
      %152 = sbr.rel (0) target = $region61
    $region60: #{tpu_custom_call.1} parent=1 // pred_region
      _
    $region61: #{tpu_custom_call.1} parent=1 // pred_fallthru
      _
    // Predicated region
    $region62: #{tpu_custom_call.1} parent=1 // pred_check
      _
    $region63: #{tpu_custom_call.1} parent=1 // pred_check_branch
      %154 = sbr.rel (0) target = $region65
    $region64: #{tpu_custom_call.1} parent=1 // pred_region
      %156 = dma.done [#allocation3], 2048
    $region65: #{tpu_custom_call.1} parent=1 // pred_fallthru
      _
    // Predicated region
    $region66: #{tpu_custom_call.1} parent=1 // pred_check
      _
    $region67: #{tpu_custom_call.1} parent=1 // pred_check_branch
      %158 = sbr.rel (0) target = $region69
    $region68: #{tpu_custom_call.1} parent=1 // pred_region
      %160 = dma.done [#allocation6], 2048
    $region69: #{tpu_custom_call.1} parent=1 // pred_fallthru
      _
    // Predicated region
    $region70: #{tpu_custom_call.1} parent=1 // pred_check
      _
    $region71: #{tpu_custom_call.1} parent=1 // pred_check_branch
      %162 = sbr.rel (0) target = $region73
    $region72: #{tpu_custom_call.1} parent=1 // pred_region
      %164 = dma.done [#allocation6], 128
    $region73: #{tpu_custom_call.1} parent=1 // pred_fallthru
      _
    // Predicated region
    $region74: #{tpu_custom_call.1} parent=1 // pred_check
      _
    $region75: #{tpu_custom_call.1} parent=1 // pred_check_branch
      %166 = sbr.rel (0) target = $region77
    $region76: #{tpu_custom_call.1} parent=1 // pred_region
      %168 = dma.done [#allocation9], 2048
    $region77: #{tpu_custom_call.1} parent=1 // pred_fallthru
      _
    // Predicated region
    $region78: #{tpu_custom_call.1} parent=1 // pred_check
      _
    $region79: #{tpu_custom_call.1} parent=1 // pred_check_branch
      %170 = sbr.rel (0) target = $region81
    $region80: #{tpu_custom_call.1} parent=1 // pred_region
      %172 = dma.done [#allocation9], 2048
    $region81: #{tpu_custom_call.1} parent=1 // pred_fallthru
      _
    // Predicated region
    $region82: #{tpu_custom_call.1} parent=1 // pred_check
      _
    $region83: #{tpu_custom_call.1} parent=1 // pred_check_branch
      %174 = sbr.rel (0) target = $region85
    $region84: #{tpu_custom_call.1} parent=1 // pred_region
      %176 = dma.done [#allocation12], 2048
    $region85: #{tpu_custom_call.1} parent=1 // pred_fallthru
      _
    // Predicated region
    $region86: #{tpu_custom_call.1} parent=1 // pred_check
      _
    $region87: #{tpu_custom_call.1} parent=1 // pred_check_branch
      %178 = sbr.rel (0) target = $region89
    $region88: #{tpu_custom_call.1} parent=1 // pred_region
      %180 = dma.done [#allocation12], 2048
    $region89: #{tpu_custom_call.1} parent=1 // pred_fallthru
      _
    // Predicated region
    $region90: #{tpu_custom_call.1} parent=1 // pred_check
      _
    $region91: #{tpu_custom_call.1} parent=1 // pred_check_branch
      %182 = sbr.rel (0) target = $region93
    $region92: #{tpu_custom_call.1} parent=1 // pred_region
      %184 = dma.done [#allocation15], 2048
    $region93: #{tpu_custom_call.1} parent=1 // pred_fallthru
      _
    // Predicated region
    $region94: #{tpu_custom_call.1} parent=1 // pred_check
      _
    $region95: #{tpu_custom_call.1} parent=1 // pred_check_branch
      %186 = sbr.rel (0) target = $region97
    $region96: #{tpu_custom_call.1} parent=1 // pred_region
      %188 = dma.done [#allocation15], 2048
    $region97: #{tpu_custom_call.1} parent=1 // pred_fallthru
      _
    %v189 = vld [vmem:[#allocation5] sm:$0xff]
    %v190 = vld [vmem:[#allocation5 + $0x8] sm:$0xff]
    %v191 = vld [vmem:[#allocation5 + $0x10] sm:$0xff]
    %v192 = vld [vmem:[#allocation5 + $0x18] sm:$0xff]
    %v193 = vld [vmem:[#allocation5 + $0x20] sm:$0xff]
    %v194 = vld [vmem:[#allocation5 + $0x28] sm:$0xff]
    %v195 = vld [vmem:[#allocation5 + $0x30] sm:$0xff]
    %v196 = vld [vmem:[#allocation5 + $0x38] sm:$0xff]
    %v197 = vld [vmem:[#allocation5 + $0x40] sm:$0xff]
    %v198 = vld [vmem:[#allocation5 + $0x48] sm:$0xff]
    %v199 = vld [vmem:[#allocation5 + $0x50] sm:$0xff]
    %v200 = vld [vmem:[#allocation5 + $0x58] sm:$0xff]
    %v201 = vld [vmem:[#allocation5 + $0x60] sm:$0xff]
    %v202 = vld [vmem:[#allocation5 + $0x68] sm:$0xff]
    %v203 = vld [vmem:[#allocation5 + $0x70] sm:$0xff]
    %v204 = vld [vmem:[#allocation5 + $0x78] sm:$0xff]
    %v205 = vld [vmem:[#allocation7] sm:$0xff]
    %v206 = vld [vmem:[#allocation2] sm:$0xff]
    %v207 = vld [vmem:[#allocation2 + $0x8] sm:$0xff]
    %v208 = vld [vmem:[#allocation2 + $0x10] sm:$0xff]
    %v209 = vld [vmem:[#allocation2 + $0x18] sm:$0xff]
    %v210 = vld [vmem:[#allocation2 + $0x20] sm:$0xff]
    %v211 = vld [vmem:[#allocation2 + $0x28] sm:$0xff]
    %v212 = vld [vmem:[#allocation2 + $0x30] sm:$0xff]
    %v213 = vld [vmem:[#allocation2 + $0x38] sm:$0xff]
    %v214 = vld [vmem:[#allocation2 + $0x40] sm:$0xff]
    %v215 = vld [vmem:[#allocation2 + $0x48] sm:$0xff]
    %v216 = vld [vmem:[#allocation2 + $0x50] sm:$0xff]
    %v217 = vld [vmem:[#allocation2 + $0x58] sm:$0xff]
    %v218 = vld [vmem:[#allocation2 + $0x60] sm:$0xff]
    %v219 = vld [vmem:[#allocation2 + $0x68] sm:$0xff]
    %v220 = vld [vmem:[#allocation2 + $0x70] sm:$0xff]
    %v221 = vld [vmem:[#allocation2 + $0x78] sm:$0xff]
    %v222 = vld [vmem:[#allocation8] sm:$0xff]
    %v223 = vld [vmem:[#allocation8 + $0x8] sm:$0xff]
    %v224 = vld [vmem:[#allocation8 + $0x10] sm:$0xff]
    %v225 = vld [vmem:[#allocation8 + $0x18] sm:$0xff]
    %v226 = vld [vmem:[#allocation8 + $0x20] sm:$0xff]
    %v227 = vld [vmem:[#allocation8 + $0x28] sm:$0xff]
    %v228 = vld [vmem:[#allocation8 + $0x30] sm:$0xff]
    %v229 = vld [vmem:[#allocation8 + $0x38] sm:$0xff]
    %v230 = vld [vmem:[#allocation8 + $0x40] sm:$0xff]
    %v231 = vld [vmem:[#allocation8 + $0x48] sm:$0xff]
    %v232 = vld [vmem:[#allocation8 + $0x50] sm:$0xff]
    %v233 = vld [vmem:[#allocation8 + $0x58] sm:$0xff]
    %v234 = vld [vmem:[#allocation8 + $0x60] sm:$0xff]
    %v235 = vld [vmem:[#allocation8 + $0x68] sm:$0xff]
    %v236 = vld [vmem:[#allocation8 + $0x70] sm:$0xff]
    %v237 = vld [vmem:[#allocation8 + $0x78] sm:$0xff]
    %v238 = vld [vmem:[%s4] sm:$0x1]
    %v239 = vld [vmem:[#allocation10] sm:$0xff]
    %v240 = vld [vmem:[#allocation10 + $0x8] sm:$0xff]
    %v241 = vld [vmem:[#allocation10 + $0x10] sm:$0xff]
    %v242 = vld [vmem:[#allocation10 + $0x18] sm:$0xff]
    %v243 = vld [vmem:[#allocation10 + $0x20] sm:$0xff]
    %v244 = vld [vmem:[#allocation10 + $0x28] sm:$0xff]
    %v245 = vld [vmem:[#allocation10 + $0x30] sm:$0xff]
    %v246 = vld [vmem:[#allocation10 + $0x38] sm:$0xff]
    %v247 = vld [vmem:[#allocation10 + $0x40] sm:$0xff]
    %v248 = vld [vmem:[#allocation10 + $0x48] sm:$0xff]
    %v249 = vld [vmem:[#allocation10 + $0x50] sm:$0xff]
    %v250 = vld [vmem:[#allocation10 + $0x58] sm:$0xff]
    %v251 = vld [vmem:[#allocation10 + $0x60] sm:$0xff]
    %v252 = vld [vmem:[#allocation10 + $0x68] sm:$0xff]
    %v253 = vld [vmem:[#allocation10 + $0x70] sm:$0xff]
    %v254 = vld [vmem:[#allocation10 + $0x78] sm:$0xff]
    %v255 = vld [vmem:[%s6] sm:$0x1]
    %256 = vmatpush.msra.mxu0 %v221
    %257 = vmatpush.msra.mxu0 %v220
    %258 = vmatpush.msra.mxu0 %v219
    %259 = vmatpush.msra.mxu0 %v218
    %260 = vmatpush.msra.mxu0 %v217
    %261 = vmatpush.msra.mxu0 %v216
    %262 = vmatpush.msra.mxu0 %v215
    %263 = vmatpush.msra.mxu0 %v214
    %264 = vmatpush.msra.mxu0 %v213
    %265 = vmatpush.msra.mxu0 %v212
    %266 = vmatpush.msra.mxu0 %v211
    %267 = vmatpush.msra.mxu0 %v210
    %268 = vmatpush.msra.mxu0 %v209
    %269 = vmatpush.msra.mxu0 %v208
    %270 = vmatpush.msra.mxu0 %v207
    %271 = vmatpush.msra.mxu0 %v206
    %272 = vmatmul.f32.gmra.mxu0 %v189
    %v273 = vpop.f32.mrf.mxu0
    %v274 = vadd.f32 0.0, %v273
    %275 = vmatmul.f32.gmra.mxu0 %v190
    %v276 = vpop.f32.mrf.mxu0
    %v277 = vadd.f32 0.0, %v276
    %278 = vmatmul.f32.gmra.mxu0 %v191
    %v279 = vpop.f32.mrf.mxu0
    %v280 = vadd.f32 0.0, %v279
    %281 = vmatmul.f32.gmra.mxu0 %v192
    %v282 = vpop.f32.mrf.mxu0
    %v283 = vadd.f32 0.0, %v282
    %284 = vmatmul.f32.gmra.mxu0 %v193
    %v285 = vpop.f32.mrf.mxu0
    %v286 = vadd.f32 0.0, %v285
    %287 = vmatmul.f32.gmra.mxu0 %v194
    %v288 = vpop.f32.mrf.mxu0
    %v289 = vadd.f32 0.0, %v288
    %290 = vmatmul.f32.gmra.mxu0 %v195
    %v291 = vpop.f32.mrf.mxu0
    %v292 = vadd.f32 0.0, %v291
    %293 = vmatmul.f32.gmra.mxu0 %v196
    %v294 = vpop.f32.mrf.mxu0
    %v295 = vadd.f32 0.0, %v294
    %296 = vmatmul.f32.gmra.mxu0 %v197
    %v297 = vpop.f32.mrf.mxu0
    %v298 = vadd.f32 0.0, %v297
    %299 = vmatmul.f32.gmra.mxu0 %v198
    %v300 = vpop.f32.mrf.mxu0
    %v301 = vadd.f32 0.0, %v300
    %302 = vmatmul.f32.gmra.mxu0 %v199
    %v303 = vpop.f32.mrf.mxu0
    %v304 = vadd.f32 0.0, %v303
    %305 = vmatmul.f32.gmra.mxu0 %v200
    %v306 = vpop.f32.mrf.mxu0
    %v307 = vadd.f32 0.0, %v306
    %308 = vmatmul.f32.gmra.mxu0 %v201
    %v309 = vpop.f32.mrf.mxu0
    %v310 = vadd.f32 0.0, %v309
    %311 = vmatmul.f32.gmra.mxu0 %v202
    %v312 = vpop.f32.mrf.mxu0
    %v313 = vadd.f32 0.0, %v312
    %314 = vmatmul.f32.gmra.mxu0 %v203
    %v315 = vpop.f32.mrf.mxu0
    %v316 = vadd.f32 0.0, %v315
    %317 = vmatmul.f32.gmra.mxu0 %v204
    %v318 = vpop.f32.mrf.mxu0
    %v319 = vadd.f32 0.0, %v318
    %320 = vdwg.mxu0
    %v321 = vadd.f32 %v206, %v274
    %v322 = vadd.f32 %v207, %v277
    %v323 = vadd.f32 %v208, %v280
    %v324 = vadd.f32 %v209, %v283
    %v325 = vadd.f32 %v210, %v286
    %v326 = vadd.f32 %v211, %v289
    %v327 = vadd.f32 %v212, %v292
    %v328 = vadd.f32 %v213, %v295
    %v329 = vadd.f32 %v214, %v298
    %v330 = vadd.f32 %v215, %v301
    %v331 = vadd.f32 %v216, %v304
    %v332 = vadd.f32 %v217, %v307
    %v333 = vadd.f32 %v218, %v310
    %v334 = vadd.f32 %v219, %v313
    %v335 = vadd.f32 %v220, %v316
    %v336 = vadd.f32 %v221, %v319
    %v338 = vperm.slane %v238, 0
    %340 = vmatpush.msra.mxu0 %v237
    %341 = vmatpush.msra.mxu0 %v236
    %342 = vmatpush.msra.mxu0 %v235
    %343 = vmatpush.msra.mxu0 %v234
    %344 = vmatpush.msra.mxu0 %v233
    %345 = vmatpush.msra.mxu0 %v232
    %346 = vmatpush.msra.mxu0 %v231
    %347 = vmatpush.msra.mxu0 %v230
    %348 = vmatpush.msra.mxu0 %v229
    %349 = vmatpush.msra.mxu0 %v228
    %350 = vmatpush.msra.mxu0 %v227
    %351 = vmatpush.msra.mxu0 %v226
    %352 = vmatpush.msra.mxu0 %v225
    %353 = vmatpush.msra.mxu0 %v224
    %354 = vmatpush.msra.mxu0 %v223
    %355 = vmatpush.msra.mxu0 %v222
    %356 = vmatmul.f32.gmra.mxu0 %v321
    %v357 = vpop.f32.mrf.mxu0
    %v358 = vadd.f32 %v338, %v357
    %359 = vmatmul.f32.gmra.mxu0 %v322
    %v360 = vpop.f32.mrf.mxu0
    %v361 = vadd.f32 %v338, %v360
    %362 = vmatmul.f32.gmra.mxu0 %v323
    %v363 = vpop.f32.mrf.mxu0
    %v364 = vadd.f32 %v338, %v363
    %365 = vmatmul.f32.gmra.mxu0 %v324
    %v366 = vpop.f32.mrf.mxu0
    %v367 = vadd.f32 %v338, %v366
    %368 = vmatmul.f32.gmra.mxu0 %v325
    %v369 = vpop.f32.mrf.mxu0
    %v370 = vadd.f32 %v338, %v369
    %371 = vmatmul.f32.gmra.mxu0 %v326
    %v372 = vpop.f32.mrf.mxu0
    %v373 = vadd.f32 %v338, %v372
    %374 = vmatmul.f32.gmra.mxu0 %v327
    %v375 = vpop.f32.mrf.mxu0
    %v376 = vadd.f32 %v338, %v375
    %377 = vmatmul.f32.gmra.mxu0 %v328
    %v378 = vpop.f32.mrf.mxu0
    %v379 = vadd.f32 %v338, %v378
    %380 = vmatmul.f32.gmra.mxu0 %v329
    %v381 = vpop.f32.mrf.mxu0
    %v382 = vadd.f32 %v338, %v381
    %383 = vmatmul.f32.gmra.mxu0 %v330
    %v384 = vpop.f32.mrf.mxu0
    %v385 = vadd.f32 %v338, %v384
    %386 = vmatmul.f32.gmra.mxu0 %v331
    %v387 = vpop.f32.mrf.mxu0
    %v388 = vadd.f32 %v338, %v387
    %389 = vmatmul.f32.gmra.mxu0 %v332
    %v390 = vpop.f32.mrf.mxu0
    %v391 = vadd.f32 %v338, %v390
    %392 = vmatmul.f32.gmra.mxu0 %v333
    %v393 = vpop.f32.mrf.mxu0
    %v394 = vadd.f32 %v338, %v393
    %395 = vmatmul.f32.gmra.mxu0 %v334
    %v396 = vpop.f32.mrf.mxu0
    %v397 = vadd.f32 %v338, %v396
    %398 = vmatmul.f32.gmra.mxu0 %v335
    %v399 = vpop.f32.mrf.mxu0
    %v400 = vadd.f32 %v338, %v399
    %401 = vmatmul.f32.gmra.mxu0 %v336
    %v402 = vpop.f32.mrf.mxu0
    %v403 = vadd.f32 %v338, %v402
    %404 = vdwg.mxu0
    %v405 = vmax.f32 %v358, 0.0
    %v406 = vmax.f32 %v361, 0.0
    %v407 = vmax.f32 %v364, 0.0
    %v408 = vmax.f32 %v367, 0.0
    %v409 = vmax.f32 %v370, 0.0
    %v410 = vmax.f32 %v373, 0.0
    %v411 = vmax.f32 %v376, 0.0
    %v412 = vmax.f32 %v379, 0.0
    %v413 = vmax.f32 %v382, 0.0
    %v414 = vmax.f32 %v385, 0.0
    %v415 = vmax.f32 %v388, 0.0
    %v416 = vmax.f32 %v391, 0.0
    %v417 = vmax.f32 %v394, 0.0
    %v418 = vmax.f32 %v397, 0.0
    %v419 = vmax.f32 %v400, 0.0
    %v420 = vmax.f32 %v403, 0.0
    %v422 = vperm.slane %v255, 0
    %424 = vmatpush.msra.mxu0 %v254
    %425 = vmatpush.msra.mxu0 %v253
    %426 = vmatpush.msra.mxu0 %v252
    %427 = vmatpush.msra.mxu0 %v251
    %428 = vmatpush.msra.mxu0 %v250
    %429 = vmatpush.msra.mxu0 %v249
    %430 = vmatpush.msra.mxu0 %v248
    %431 = vmatpush.msra.mxu0 %v247
    %432 = vmatpush.msra.mxu0 %v246
    %433 = vmatpush.msra.mxu0 %v245
    %434 = vmatpush.msra.mxu0 %v244
    %435 = vmatpush.msra.mxu0 %v243
    %436 = vmatpush.msra.mxu0 %v242
    %437 = vmatpush.msra.mxu0 %v241
    %438 = vmatpush.msra.mxu0 %v240
    %439 = vmatpush.msra.mxu0 %v239
    %440 = vmatmul.f32.gmra.mxu0 %v405
    %v441 = vpop.f32.mrf.mxu0
    %v442 = vadd.f32 %v422, %v441
    %443 = vmatmul.f32.gmra.mxu0 %v406
    %v444 = vpop.f32.mrf.mxu0
    %v445 = vadd.f32 %v422, %v444
    %446 = vmatmul.f32.gmra.mxu0 %v407
    %v447 = vpop.f32.mrf.mxu0
    %v448 = vadd.f32 %v422, %v447
    %449 = vmatmul.f32.gmra.mxu0 %v408
    %v450 = vpop.f32.mrf.mxu0
    %v451 = vadd.f32 %v422, %v450
    %452 = vmatmul.f32.gmra.mxu0 %v409
    %v453 = vpop.f32.mrf.mxu0
    %v454 = vadd.f32 %v422, %v453
    %455 = vmatmul.f32.gmra.mxu0 %v410
    %v456 = vpop.f32.mrf.mxu0
    %v457 = vadd.f32 %v422, %v456
    %458 = vmatmul.f32.gmra.mxu0 %v411
    %v459 = vpop.f32.mrf.mxu0
    %v460 = vadd.f32 %v422, %v459
    %461 = vmatmul.f32.gmra.mxu0 %v412
    %v462 = vpop.f32.mrf.mxu0
    %v463 = vadd.f32 %v422, %v462
    %464 = vmatmul.f32.gmra.mxu0 %v413
    %v465 = vpop.f32.mrf.mxu0
    %v466 = vadd.f32 %v422, %v465
    %467 = vmatmul.f32.gmra.mxu0 %v414
    %v468 = vpop.f32.mrf.mxu0
    %v469 = vadd.f32 %v422, %v468
    %470 = vmatmul.f32.gmra.mxu0 %v415
    %v471 = vpop.f32.mrf.mxu0
    %v472 = vadd.f32 %v422, %v471
    %473 = vmatmul.f32.gmra.mxu0 %v416
    %v474 = vpop.f32.mrf.mxu0
    %v475 = vadd.f32 %v422, %v474
    %476 = vmatmul.f32.gmra.mxu0 %v417
    %v477 = vpop.f32.mrf.mxu0
    %v478 = vadd.f32 %v422, %v477
    %479 = vmatmul.f32.gmra.mxu0 %v418
    %v480 = vpop.f32.mrf.mxu0
    %v481 = vadd.f32 %v422, %v480
    %482 = vmatmul.f32.gmra.mxu0 %v419
    %v483 = vpop.f32.mrf.mxu0
    %v484 = vadd.f32 %v422, %v483
    %485 = vmatmul.f32.gmra.mxu0 %v420
    %v486 = vpop.f32.mrf.mxu0
    %v487 = vadd.f32 %v422, %v486
    %488 = vdwg.mxu0
    %v489 = vmax.f32 %v442, 0.0
    %v490 = vmax.f32 %v445, 0.0
    %v491 = vmax.f32 %v448, 0.0
    %v492 = vmax.f32 %v451, 0.0
    %v493 = vmax.f32 %v454, 0.0
    %v494 = vmax.f32 %v457, 0.0
    %v495 = vmax.f32 %v460, 0.0
    %v496 = vmax.f32 %v463, 0.0
    %v497 = vmax.f32 %v466, 0.0
    %v498 = vmax.f32 %v469, 0.0
    %v499 = vmax.f32 %v472, 0.0
    %v500 = vmax.f32 %v475, 0.0
    %v501 = vmax.f32 %v478, 0.0
    %v502 = vmax.f32 %v481, 0.0
    %v503 = vmax.f32 %v484, 0.0
    %v504 = vmax.f32 %v487, 0.0
    %505 = vmatpush.msra.mxu0 %v504
    %506 = vmatpush.msra.mxu0 %v503
    %507 = vmatpush.msra.mxu0 %v502
    %508 = vmatpush.msra.mxu0 %v501
    %509 = vmatpush.msra.mxu0 %v500
    %510 = vmatpush.msra.mxu0 %v499
    %511 = vmatpush.msra.mxu0 %v498
    %512 = vmatpush.msra.mxu0 %v497
    %513 = vmatpush.msra.mxu0 %v496
    %514 = vmatpush.msra.mxu0 %v495
    %515 = vmatpush.msra.mxu0 %v494
    %516 = vmatpush.msra.mxu0 %v493
    %517 = vmatpush.msra.mxu0 %v492
    %518 = vmatpush.msra.mxu0 %v491
    %519 = vmatpush.msra.mxu0 %v490
    %520 = vmatpush.msra.mxu0 %v489
    %521 = vmatmul.f32.gmra.mxu0 %v205
    %v522 = vpop.f32.mrf.mxu0
    %v523 = vadd.f32 0.0, %v522
    %524 = vdwg.mxu0
    %525 = vst [vmem:[#allocation17] sm:$0xff] %v523
    %v526 = vld [vmem:[#allocation11] sm:$0xff]
    %v527 = vld [vmem:[#allocation11 + $0x8] sm:$0xff]
    %v528 = vld [vmem:[#allocation11 + $0x10] sm:$0xff]
    %v529 = vld [vmem:[#allocation11 + $0x18] sm:$0xff]
    %v530 = vld [vmem:[#allocation11 + $0x20] sm:$0xff]
    %v531 = vld [vmem:[#allocation11 + $0x28] sm:$0xff]
    %v532 = vld [vmem:[#allocation11 + $0x30] sm:$0xff]
    %v533 = vld [vmem:[#allocation11 + $0x38] sm:$0xff]
    %v534 = vld [vmem:[#allocation11 + $0x40] sm:$0xff]
    %v535 = vld [vmem:[#allocation11 + $0x48] sm:$0xff]
    %v536 = vld [vmem:[#allocation11 + $0x50] sm:$0xff]
    %v537 = vld [vmem:[#allocation11 + $0x58] sm:$0xff]
    %v538 = vld [vmem:[#allocation11 + $0x60] sm:$0xff]
    %v539 = vld [vmem:[#allocation11 + $0x68] sm:$0xff]
    %v540 = vld [vmem:[#allocation11 + $0x70] sm:$0xff]
    %v541 = vld [vmem:[#allocation11 + $0x78] sm:$0xff]
    %v542 = vld [vmem:[%s8] sm:$0x1]
    %v543 = vld [vmem:[#allocation13] sm:$0xff]
    %v544 = vld [vmem:[#allocation13 + $0x8] sm:$0xff]
    %v545 = vld [vmem:[#allocation13 + $0x10] sm:$0xff]
    %v546 = vld [vmem:[#allocation13 + $0x18] sm:$0xff]
    %v547 = vld [vmem:[#allocation13 + $0x20] sm:$0xff]
    %v548 = vld [vmem:[#allocation13 + $0x28] sm:$0xff]
    %v549 = vld [vmem:[#allocation13 + $0x30] sm:$0xff]
    %v550 = vld [vmem:[#allocation13 + $0x38] sm:$0xff]
    %v551 = vld [vmem:[#allocation13 + $0x40] sm:$0xff]
    %v552 = vld [vmem:[#allocation13 + $0x48] sm:$0xff]
    %v553 = vld [vmem:[#allocation13 + $0x50] sm:$0xff]
    %v554 = vld [vmem:[#allocation13 + $0x58] sm:$0xff]
    %v555 = vld [vmem:[#allocation13 + $0x60] sm:$0xff]
    %v556 = vld [vmem:[#allocation13 + $0x68] sm:$0xff]
    %v557 = vld [vmem:[#allocation13 + $0x70] sm:$0xff]
    %v558 = vld [vmem:[#allocation13 + $0x78] sm:$0xff]
    %v559 = vld [vmem:[%s10] sm:$0x1]
    %560 = vmatpush.msra.mxu0 %v504
    %561 = vmatpush.msra.mxu0 %v503
    %562 = vmatpush.msra.mxu0 %v502
    %563 = vmatpush.msra.mxu0 %v501
    %564 = vmatpush.msra.mxu0 %v500
    %565 = vmatpush.msra.mxu0 %v499
    %566 = vmatpush.msra.mxu0 %v498
    %567 = vmatpush.msra.mxu0 %v497
    %568 = vmatpush.msra.mxu0 %v496
    %569 = vmatpush.msra.mxu0 %v495
    %570 = vmatpush.msra.mxu0 %v494
    %571 = vmatpush.msra.mxu0 %v493
    %572 = vmatpush.msra.mxu0 %v492
    %573 = vmatpush.msra.mxu0 %v491
    %574 = vmatpush.msra.mxu0 %v490
    %575 = vmatpush.msra.mxu0 %v489
    %576 = vmatmul.f32.gmra.mxu0 %v189
    %v577 = vpop.f32.mrf.mxu0
    %v578 = vadd.f32 0.0, %v577
    %579 = vmatmul.f32.gmra.mxu0 %v190
    %v580 = vpop.f32.mrf.mxu0
    %v581 = vadd.f32 0.0, %v580
    %582 = vmatmul.f32.gmra.mxu0 %v191
    %v583 = vpop.f32.mrf.mxu0
    %v584 = vadd.f32 0.0, %v583
    %585 = vmatmul.f32.gmra.mxu0 %v192
    %v586 = vpop.f32.mrf.mxu0
    %v587 = vadd.f32 0.0, %v586
    %588 = vmatmul.f32.gmra.mxu0 %v193
    %v589 = vpop.f32.mrf.mxu0
    %v590 = vadd.f32 0.0, %v589
    %591 = vmatmul.f32.gmra.mxu0 %v194
    %v592 = vpop.f32.mrf.mxu0
    %v593 = vadd.f32 0.0, %v592
    %594 = vmatmul.f32.gmra.mxu0 %v195
    %v595 = vpop.f32.mrf.mxu0
    %v596 = vadd.f32 0.0, %v595
    %597 = vmatmul.f32.gmra.mxu0 %v196
    %v598 = vpop.f32.mrf.mxu0
    %v599 = vadd.f32 0.0, %v598
    %600 = vmatmul.f32.gmra.mxu0 %v197
    %v601 = vpop.f32.mrf.mxu0
    %v602 = vadd.f32 0.0, %v601
    %603 = vmatmul.f32.gmra.mxu0 %v198
    %v604 = vpop.f32.mrf.mxu0
    %v605 = vadd.f32 0.0, %v604
    %606 = vmatmul.f32.gmra.mxu0 %v199
    %v607 = vpop.f32.mrf.mxu0
    %v608 = vadd.f32 0.0, %v607
    %609 = vmatmul.f32.gmra.mxu0 %v200
    %v610 = vpop.f32.mrf.mxu0
    %v611 = vadd.f32 0.0, %v610
    %612 = vmatmul.f32.gmra.mxu0 %v201
    %v613 = vpop.f32.mrf.mxu0
    %v614 = vadd.f32 0.0, %v613
    %615 = vmatmul.f32.gmra.mxu0 %v202
    %v616 = vpop.f32.mrf.mxu0
    %v617 = vadd.f32 0.0, %v616
    %618 = vmatmul.f32.gmra.mxu0 %v203
    %v619 = vpop.f32.mrf.mxu0
    %v620 = vadd.f32 0.0, %v619
    %621 = vmatmul.f32.gmra.mxu0 %v204
    %v622 = vpop.f32.mrf.mxu0
    %v623 = vadd.f32 0.0, %v622
    %624 = vdwg.mxu0
    %v625 = vadd.f32 %v489, %v578
    %v626 = vadd.f32 %v490, %v581
    %v627 = vadd.f32 %v491, %v584
    %v628 = vadd.f32 %v492, %v587
    %v629 = vadd.f32 %v493, %v590
    %v630 = vadd.f32 %v494, %v593
    %v631 = vadd.f32 %v495, %v596
    %v632 = vadd.f32 %v496, %v599
    %v633 = vadd.f32 %v497, %v602
    %v634 = vadd.f32 %v498, %v605
    %v635 = vadd.f32 %v499, %v608
    %v636 = vadd.f32 %v500, %v611
    %v637 = vadd.f32 %v501, %v614
    %v638 = vadd.f32 %v502, %v617
    %v639 = vadd.f32 %v503, %v620
    %v640 = vadd.f32 %v504, %v623
    %v642 = vperm.slane %v542, 0
    %644 = vmatpush.msra.mxu0 %v541
    %645 = vmatpush.msra.mxu0 %v540
    %646 = vmatpush.msra.mxu0 %v539
    %647 = vmatpush.msra.mxu0 %v538
    %648 = vmatpush.msra.mxu0 %v537
    %649 = vmatpush.msra.mxu0 %v536
    %650 = vmatpush.msra.mxu0 %v535
    %651 = vmatpush.msra.mxu0 %v534
    %652 = vmatpush.msra.mxu0 %v533
    %653 = vmatpush.msra.mxu0 %v532
    %654 = vmatpush.msra.mxu0 %v531
    %655 = vmatpush.msra.mxu0 %v530
    %656 = vmatpush.msra.mxu0 %v529
    %657 = vmatpush.msra.mxu0 %v528
    %658 = vmatpush.msra.mxu0 %v527
    %659 = vmatpush.msra.mxu0 %v526
    %660 = vmatmul.f32.gmra.mxu0 %v625
    %v661 = vpop.f32.mrf.mxu0
    %v662 = vadd.f32 %v642, %v661
    %663 = vmatmul.f32.gmra.mxu0 %v626
    %v664 = vpop.f32.mrf.mxu0
    %v665 = vadd.f32 %v642, %v664
    %666 = vmatmul.f32.gmra.mxu0 %v627
    %v667 = vpop.f32.mrf.mxu0
    %v668 = vadd.f32 %v642, %v667
    %669 = vmatmul.f32.gmra.mxu0 %v628
    %v670 = vpop.f32.mrf.mxu0
    %v671 = vadd.f32 %v642, %v670
    %672 = vmatmul.f32.gmra.mxu0 %v629
    %v673 = vpop.f32.mrf.mxu0
    %v674 = vadd.f32 %v642, %v673
    %675 = vmatmul.f32.gmra.mxu0 %v630
    %v676 = vpop.f32.mrf.mxu0
    %v677 = vadd.f32 %v642, %v676
    %678 = vmatmul.f32.gmra.mxu0 %v631
    %v679 = vpop.f32.mrf.mxu0
    %v680 = vadd.f32 %v642, %v679
    %681 = vmatmul.f32.gmra.mxu0 %v632
    %v682 = vpop.f32.mrf.mxu0
    %v683 = vadd.f32 %v642, %v682
    %684 = vmatmul.f32.gmra.mxu0 %v633
    %v685 = vpop.f32.mrf.mxu0
    %v686 = vadd.f32 %v642, %v685
    %687 = vmatmul.f32.gmra.mxu0 %v634
    %v688 = vpop.f32.mrf.mxu0
    %v689 = vadd.f32 %v642, %v688
    %690 = vmatmul.f32.gmra.mxu0 %v635
    %v691 = vpop.f32.mrf.mxu0
    %v692 = vadd.f32 %v642, %v691
    %693 = vmatmul.f32.gmra.mxu0 %v636
    %v694 = vpop.f32.mrf.mxu0
    %v695 = vadd.f32 %v642, %v694
    %696 = vmatmul.f32.gmra.mxu0 %v637
    %v697 = vpop.f32.mrf.mxu0
    %v698 = vadd.f32 %v642, %v697
    %699 = vmatmul.f32.gmra.mxu0 %v638
    %v700 = vpop.f32.mrf.mxu0
    %v701 = vadd.f32 %v642, %v700
    %702 = vmatmul.f32.gmra.mxu0 %v639
    %v703 = vpop.f32.mrf.mxu0
    %v704 = vadd.f32 %v642, %v703
    %705 = vmatmul.f32.gmra.mxu0 %v640
    %v706 = vpop.f32.mrf.mxu0
    %v707 = vadd.f32 %v642, %v706
    %708 = vdwg.mxu0
    %v709 = vmax.f32 %v662, 0.0
    %v710 = vmax.f32 %v665, 0.0
    %v711 = vmax.f32 %v668, 0.0
    %v712 = vmax.f32 %v671, 0.0
    %v713 = vmax.f32 %v674, 0.0
    %v714 = vmax.f32 %v677, 0.0
    %v715 = vmax.f32 %v680, 0.0
    %v716 = vmax.f32 %v683, 0.0
    %v717 = vmax.f32 %v686, 0.0
    %v718 = vmax.f32 %v689, 0.0
    %v719 = vmax.f32 %v692, 0.0
    %v720 = vmax.f32 %v695, 0.0
    %v721 = vmax.f32 %v698, 0.0
    %v722 = vmax.f32 %v701, 0.0
    %v723 = vmax.f32 %v704, 0.0
    %v724 = vmax.f32 %v707, 0.0
    %v726 = vperm.slane %v559, 0
    %728 = vmatpush.msra.mxu0 %v558
    %729 = vmatpush.msra.mxu0 %v557
    %730 = vmatpush.msra.mxu0 %v556
    %731 = vmatpush.msra.mxu0 %v555
    %732 = vmatpush.msra.mxu0 %v554
    %733 = vmatpush.msra.mxu0 %v553
    %734 = vmatpush.msra.mxu0 %v552
    %735 = vmatpush.msra.mxu0 %v551
    %736 = vmatpush.msra.mxu0 %v550
    %737 = vmatpush.msra.mxu0 %v549
    %738 = vmatpush.msra.mxu0 %v548
    %739 = vmatpush.msra.mxu0 %v547
    %740 = vmatpush.msra.mxu0 %v546
    %741 = vmatpush.msra.mxu0 %v545
    %742 = vmatpush.msra.mxu0 %v544
    %743 = vmatpush.msra.mxu0 %v543
    %744 = vmatmul.f32.gmra.mxu0 %v709
    %v745 = vpop.f32.mrf.mxu0
    %v746 = vadd.f32 %v726, %v745
    %747 = vmatmul.f32.gmra.mxu0 %v710
    %v748 = vpop.f32.mrf.mxu0
    %v749 = vadd.f32 %v726, %v748
    %750 = vmatmul.f32.gmra.mxu0 %v711
    %v751 = vpop.f32.mrf.mxu0
    %v752 = vadd.f32 %v726, %v751
    %753 = vmatmul.f32.gmra.mxu0 %v712
    %v754 = vpop.f32.mrf.mxu0
    %v755 = vadd.f32 %v726, %v754
    %756 = vmatmul.f32.gmra.mxu0 %v713
    %v757 = vpop.f32.mrf.mxu0
    %v758 = vadd.f32 %v726, %v757
    %759 = vmatmul.f32.gmra.mxu0 %v714
    %v760 = vpop.f32.mrf.mxu0
    %v761 = vadd.f32 %v726, %v760
    %762 = vmatmul.f32.gmra.mxu0 %v715
    %v763 = vpop.f32.mrf.mxu0
    %v764 = vadd.f32 %v726, %v763
    %765 = vmatmul.f32.gmra.mxu0 %v716
    %v766 = vpop.f32.mrf.mxu0
    %v767 = vadd.f32 %v726, %v766
    %768 = vmatmul.f32.gmra.mxu0 %v717
    %v769 = vpop.f32.mrf.mxu0
    %v770 = vadd.f32 %v726, %v769
    %771 = vmatmul.f32.gmra.mxu0 %v718
    %v772 = vpop.f32.mrf.mxu0
    %v773 = vadd.f32 %v726, %v772
    %774 = vmatmul.f32.gmra.mxu0 %v719
    %v775 = vpop.f32.mrf.mxu0
    %v776 = vadd.f32 %v726, %v775
    %777 = vmatmul.f32.gmra.mxu0 %v720
    %v778 = vpop.f32.mrf.mxu0
    %v779 = vadd.f32 %v726, %v778
    %780 = vmatmul.f32.gmra.mxu0 %v721
    %v781 = vpop.f32.mrf.mxu0
    %v782 = vadd.f32 %v726, %v781
    %783 = vmatmul.f32.gmra.mxu0 %v722
    %v784 = vpop.f32.mrf.mxu0
    %v785 = vadd.f32 %v726, %v784
    %786 = vmatmul.f32.gmra.mxu0 %v723
    %v787 = vpop.f32.mrf.mxu0
    %v788 = vadd.f32 %v726, %v787
    %789 = vmatmul.f32.gmra.mxu0 %v724
    %v790 = vpop.f32.mrf.mxu0
    %v791 = vadd.f32 %v726, %v790
    %792 = vdwg.mxu0
    %v793 = vmax.f32 %v746, 0.0
    %v794 = vmax.f32 %v749, 0.0
    %v795 = vmax.f32 %v752, 0.0
    %v796 = vmax.f32 %v755, 0.0
    %v797 = vmax.f32 %v758, 0.0
    %v798 = vmax.f32 %v761, 0.0
    %v799 = vmax.f32 %v764, 0.0
    %v800 = vmax.f32 %v767, 0.0
    %v801 = vmax.f32 %v770, 0.0
    %v802 = vmax.f32 %v773, 0.0
    %v803 = vmax.f32 %v776, 0.0
    %v804 = vmax.f32 %v779, 0.0
    %v805 = vmax.f32 %v782, 0.0
    %v806 = vmax.f32 %v785, 0.0
    %v807 = vmax.f32 %v788, 0.0
    %v808 = vmax.f32 %v791, 0.0
    %809 = vmatpush.msra.mxu0 %v808
    %810 = vmatpush.msra.mxu0 %v807
    %811 = vmatpush.msra.mxu0 %v806
    %812 = vmatpush.msra.mxu0 %v805
    %813 = vmatpush.msra.mxu0 %v804
    %814 = vmatpush.msra.mxu0 %v803
    %815 = vmatpush.msra.mxu0 %v802
    %816 = vmatpush.msra.mxu0 %v801
    %817 = vmatpush.msra.mxu0 %v800
    %818 = vmatpush.msra.mxu0 %v799
    %819 = vmatpush.msra.mxu0 %v798
    %820 = vmatpush.msra.mxu0 %v797
    %821 = vmatpush.msra.mxu0 %v796
    %822 = vmatpush.msra.mxu0 %v795
    %823 = vmatpush.msra.mxu0 %v794
    %824 = vmatpush.msra.mxu0 %v793
    %825 = vmatmul.f32.gmra.mxu0 %v205
    %v826 = vpop.f32.mrf.mxu0
    %v827 = vadd.f32 0.0, %v826
    %828 = vdwg.mxu0
    %829 = vst [vmem:[#allocation17 + $0x8] sm:$0xff] %v827
    %v830 = vld [vmem:[#allocation14] sm:$0xff]
    %v831 = vld [vmem:[#allocation14 + $0x8] sm:$0xff]
    %v832 = vld [vmem:[#allocation14 + $0x10] sm:$0xff]
    %v833 = vld [vmem:[#allocation14 + $0x18] sm:$0xff]
    %v834 = vld [vmem:[#allocation14 + $0x20] sm:$0xff]
    %v835 = vld [vmem:[#allocation14 + $0x28] sm:$0xff]
    %v836 = vld [vmem:[#allocation14 + $0x30] sm:$0xff]
    %v837 = vld [vmem:[#allocation14 + $0x38] sm:$0xff]
    %v838 = vld [vmem:[#allocation14 + $0x40] sm:$0xff]
    %v839 = vld [vmem:[#allocation14 + $0x48] sm:$0xff]
    %v840 = vld [vmem:[#allocation14 + $0x50] sm:$0xff]
    %v841 = vld [vmem:[#allocation14 + $0x58] sm:$0xff]
    %v842 = vld [vmem:[#allocation14 + $0x60] sm:$0xff]
    %v843 = vld [vmem:[#allocation14 + $0x68] sm:$0xff]
    %v844 = vld [vmem:[#allocation14 + $0x70] sm:$0xff]
    %v845 = vld [vmem:[#allocation14 + $0x78] sm:$0xff]
    %v846 = vld [vmem:[%s12] sm:$0x1]
    %v847 = vld [vmem:[#allocation16] sm:$0xff]
    %v848 = vld [vmem:[#allocation16 + $0x8] sm:$0xff]
    %v849 = vld [vmem:[#allocation16 + $0x10] sm:$0xff]
    %v850 = vld [vmem:[#allocation16 + $0x18] sm:$0xff]
    %v851 = vld [vmem:[#allocation16 + $0x20] sm:$0xff]
    %v852 = vld [vmem:[#allocation16 + $0x28] sm:$0xff]
    %v853 = vld [vmem:[#allocation16 + $0x30] sm:$0xff]
    %v854 = vld [vmem:[#allocation16 + $0x38] sm:$0xff]
    %v855 = vld [vmem:[#allocation16 + $0x40] sm:$0xff]
    %v856 = vld [vmem:[#allocation16 + $0x48] sm:$0xff]
    %v857 = vld [vmem:[#allocation16 + $0x50] sm:$0xff]
    %v858 = vld [vmem:[#allocation16 + $0x58] sm:$0xff]
    %v859 = vld [vmem:[#allocation16 + $0x60] sm:$0xff]
    %v860 = vld [vmem:[#allocation16 + $0x68] sm:$0xff]
    %v861 = vld [vmem:[#allocation16 + $0x70] sm:$0xff]
    %v862 = vld [vmem:[#allocation16 + $0x78] sm:$0xff]
    %v863 = vld [vmem:[%s14] sm:$0x1]
    %864 = vmatpush.msra.mxu0 %v808
    %865 = vmatpush.msra.mxu0 %v807
    %866 = vmatpush.msra.mxu0 %v806
    %867 = vmatpush.msra.mxu0 %v805
    %868 = vmatpush.msra.mxu0 %v804
    %869 = vmatpush.msra.mxu0 %v803
    %870 = vmatpush.msra.mxu0 %v802
    %871 = vmatpush.msra.mxu0 %v801
    %872 = vmatpush.msra.mxu0 %v800
    %873 = vmatpush.msra.mxu0 %v799
    %874 = vmatpush.msra.mxu0 %v798
    %875 = vmatpush.msra.mxu0 %v797
    %876 = vmatpush.msra.mxu0 %v796
    %877 = vmatpush.msra.mxu0 %v795
    %878 = vmatpush.msra.mxu0 %v794
    %879 = vmatpush.msra.mxu0 %v793
    %880 = vmatmul.f32.gmra.mxu0 %v189
    %v881 = vpop.f32.mrf.mxu0
    %v882 = vadd.f32 0.0, %v881
    %883 = vmatmul.f32.gmra.mxu0 %v190
    %v884 = vpop.f32.mrf.mxu0
    %v885 = vadd.f32 0.0, %v884
    %886 = vmatmul.f32.gmra.mxu0 %v191
    %v887 = vpop.f32.mrf.mxu0
    %v888 = vadd.f32 0.0, %v887
    %889 = vmatmul.f32.gmra.mxu0 %v192
    %v890 = vpop.f32.mrf.mxu0
    %v891 = vadd.f32 0.0, %v890
    %892 = vmatmul.f32.gmra.mxu0 %v193
    %v893 = vpop.f32.mrf.mxu0
    %v894 = vadd.f32 0.0, %v893
    %895 = vmatmul.f32.gmra.mxu0 %v194
    %v896 = vpop.f32.mrf.mxu0
    %v897 = vadd.f32 0.0, %v896
    %898 = vmatmul.f32.gmra.mxu0 %v195
    %v899 = vpop.f32.mrf.mxu0
    %v900 = vadd.f32 0.0, %v899
    %901 = vmatmul.f32.gmra.mxu0 %v196
    %v902 = vpop.f32.mrf.mxu0
    %v903 = vadd.f32 0.0, %v902
    %904 = vmatmul.f32.gmra.mxu0 %v197
    %v905 = vpop.f32.mrf.mxu0
    %v906 = vadd.f32 0.0, %v905
    %907 = vmatmul.f32.gmra.mxu0 %v198
    %v908 = vpop.f32.mrf.mxu0
    %v909 = vadd.f32 0.0, %v908
    %910 = vmatmul.f32.gmra.mxu0 %v199
    %v911 = vpop.f32.mrf.mxu0
    %v912 = vadd.f32 0.0, %v911
    %913 = vmatmul.f32.gmra.mxu0 %v200
    %v914 = vpop.f32.mrf.mxu0
    %v915 = vadd.f32 0.0, %v914
    %916 = vmatmul.f32.gmra.mxu0 %v201
    %v917 = vpop.f32.mrf.mxu0
    %v918 = vadd.f32 0.0, %v917
    %919 = vmatmul.f32.gmra.mxu0 %v202
    %v920 = vpop.f32.mrf.mxu0
    %v921 = vadd.f32 0.0, %v920
    %922 = vmatmul.f32.gmra.mxu0 %v203
    %v923 = vpop.f32.mrf.mxu0
    %v924 = vadd.f32 0.0, %v923
    %925 = vmatmul.f32.gmra.mxu0 %v204
    %v926 = vpop.f32.mrf.mxu0
    %v927 = vadd.f32 0.0, %v926
    %928 = vdwg.mxu0
    %v929 = vadd.f32 %v793, %v882
    %v930 = vadd.f32 %v794, %v885
    %v931 = vadd.f32 %v795, %v888
    %v932 = vadd.f32 %v796, %v891
    %v933 = vadd.f32 %v797, %v894
    %v934 = vadd.f32 %v798, %v897
    %v935 = vadd.f32 %v799, %v900
    %v936 = vadd.f32 %v800, %v903
    %v937 = vadd.f32 %v801, %v906
    %v938 = vadd.f32 %v802, %v909
    %v939 = vadd.f32 %v803, %v912
    %v940 = vadd.f32 %v804, %v915
    %v941 = vadd.f32 %v805, %v918
    %v942 = vadd.f32 %v806, %v921
    %v943 = vadd.f32 %v807, %v924
    %v944 = vadd.f32 %v808, %v927
    %v946 = vperm.slane %v846, 0
    %948 = vmatpush.msra.mxu0 %v845
    %949 = vmatpush.msra.mxu0 %v844
    %950 = vmatpush.msra.mxu0 %v843
    %951 = vmatpush.msra.mxu0 %v842
    %952 = vmatpush.msra.mxu0 %v841
    %953 = vmatpush.msra.mxu0 %v840
    %954 = vmatpush.msra.mxu0 %v839
    %955 = vmatpush.msra.mxu0 %v838
    %956 = vmatpush.msra.mxu0 %v837
    %957 = vmatpush.msra.mxu0 %v836
    %958 = vmatpush.msra.mxu0 %v835
    %959 = vmatpush.msra.mxu0 %v834
    %960 = vmatpush.msra.mxu0 %v833
    %961 = vmatpush.msra.mxu0 %v832
    %962 = vmatpush.msra.mxu0 %v831
    %963 = vmatpush.msra.mxu0 %v830
    %964 = vmatmul.f32.gmra.mxu0 %v929
    %v965 = vpop.f32.mrf.mxu0
    %v966 = vadd.f32 %v946, %v965
    %967 = vmatmul.f32.gmra.mxu0 %v930
    %v968 = vpop.f32.mrf.mxu0
    %v969 = vadd.f32 %v946, %v968
    %970 = vmatmul.f32.gmra.mxu0 %v931
    %v971 = vpop.f32.mrf.mxu0
    %v972 = vadd.f32 %v946, %v971
    %973 = vmatmul.f32.gmra.mxu0 %v932
    %v974 = vpop.f32.mrf.mxu0
    %v975 = vadd.f32 %v946, %v974
    %976 = vmatmul.f32.gmra.mxu0 %v933
    %v977 = vpop.f32.mrf.mxu0
    %v978 = vadd.f32 %v946, %v977
    %979 = vmatmul.f32.gmra.mxu0 %v934
    %v980 = vpop.f32.mrf.mxu0
    %v981 = vadd.f32 %v946, %v980
    %982 = vmatmul.f32.gmra.mxu0 %v935
    %v983 = vpop.f32.mrf.mxu0
    %v984 = vadd.f32 %v946, %v983
    %985 = vmatmul.f32.gmra.mxu0 %v936
    %v986 = vpop.f32.mrf.mxu0
    %v987 = vadd.f32 %v946, %v986
    %988 = vmatmul.f32.gmra.mxu0 %v937
    %v989 = vpop.f32.mrf.mxu0
    %v990 = vadd.f32 %v946, %v989
    %991 = vmatmul.f32.gmra.mxu0 %v938
    %v992 = vpop.f32.mrf.mxu0
    %v993 = vadd.f32 %v946, %v992
    %994 = vmatmul.f32.gmra.mxu0 %v939
    %v995 = vpop.f32.mrf.mxu0
    %v996 = vadd.f32 %v946, %v995
    %997 = vmatmul.f32.gmra.mxu0 %v940
    %v998 = vpop.f32.mrf.mxu0
    %v999 = vadd.f32 %v946, %v998
    %1000 = vmatmul.f32.gmra.mxu0 %v941
    %v1001 = vpop.f32.mrf.mxu0
    %v1002 = vadd.f32 %v946, %v1001
    %1003 = vmatmul.f32.gmra.mxu0 %v942
    %v1004 = vpop.f32.mrf.mxu0
    %v1005 = vadd.f32 %v946, %v1004
    %1006 = vmatmul.f32.gmra.mxu0 %v943
    %v1007 = vpop.f32.mrf.mxu0
    %v1008 = vadd.f32 %v946, %v1007
    %1009 = vmatmul.f32.gmra.mxu0 %v944
    %v1010 = vpop.f32.mrf.mxu0
    %v1011 = vadd.f32 %v946, %v1010
    %1012 = vdwg.mxu0
    %v1013 = vmax.f32 %v966, 0.0
    %v1014 = vmax.f32 %v969, 0.0
    %v1015 = vmax.f32 %v972, 0.0
    %v1016 = vmax.f32 %v975, 0.0
    %v1017 = vmax.f32 %v978, 0.0
    %v1018 = vmax.f32 %v981, 0.0
    %v1019 = vmax.f32 %v984, 0.0
    %v1020 = vmax.f32 %v987, 0.0
    %v1021 = vmax.f32 %v990, 0.0
    %v1022 = vmax.f32 %v993, 0.0
    %v1023 = vmax.f32 %v996, 0.0
    %v1024 = vmax.f32 %v999, 0.0
    %v1025 = vmax.f32 %v1002, 0.0
    %v1026 = vmax.f32 %v1005, 0.0
    %v1027 = vmax.f32 %v1008, 0.0
    %v1028 = vmax.f32 %v1011, 0.0
    %v1030 = vperm.slane %v863, 0
    %1032 = vmatpush.msra.mxu0 %v862
    %1033 = vmatpush.msra.mxu0 %v861
    %1034 = vmatpush.msra.mxu0 %v860
    %1035 = vmatpush.msra.mxu0 %v859
    %1036 = vmatpush.msra.mxu0 %v858
    %1037 = vmatpush.msra.mxu0 %v857
    %1038 = vmatpush.msra.mxu0 %v856
    %1039 = vmatpush.msra.mxu0 %v855
    %1040 = vmatpush.msra.mxu0 %v854
    %1041 = vmatpush.msra.mxu0 %v853
    %1042 = vmatpush.msra.mxu0 %v852
    %1043 = vmatpush.msra.mxu0 %v851
    %1044 = vmatpush.msra.mxu0 %v850
    %1045 = vmatpush.msra.mxu0 %v849
    %1046 = vmatpush.msra.mxu0 %v848
    %1047 = vmatpush.msra.mxu0 %v847
    %1048 = vmatmul.f32.gmra.mxu0 %v1013
    %v1049 = vpop.f32.mrf.mxu0
    %v1050 = vadd.f32 %v1030, %v1049
    %1051 = vmatmul.f32.gmra.mxu0 %v1014
    %v1052 = vpop.f32.mrf.mxu0
    %v1053 = vadd.f32 %v1030, %v1052
    %1054 = vmatmul.f32.gmra.mxu0 %v1015
    %v1055 = vpop.f32.mrf.mxu0
    %v1056 = vadd.f32 %v1030, %v1055
    %1057 = vmatmul.f32.gmra.mxu0 %v1016
    %v1058 = vpop.f32.mrf.mxu0
    %v1059 = vadd.f32 %v1030, %v1058
    %1060 = vmatmul.f32.gmra.mxu0 %v1017
    %v1061 = vpop.f32.mrf.mxu0
    %v1062 = vadd.f32 %v1030, %v1061
    %1063 = vmatmul.f32.gmra.mxu0 %v1018
    %v1064 = vpop.f32.mrf.mxu0
    %v1065 = vadd.f32 %v1030, %v1064
    %1066 = vmatmul.f32.gmra.mxu0 %v1019
    %v1067 = vpop.f32.mrf.mxu0
    %v1068 = vadd.f32 %v1030, %v1067
    %1069 = vmatmul.f32.gmra.mxu0 %v1020
    %v1070 = vpop.f32.mrf.mxu0
    %v1071 = vadd.f32 %v1030, %v1070
    %1072 = vmatmul.f32.gmra.mxu0 %v1021
    %v1073 = vpop.f32.mrf.mxu0
    %v1074 = vadd.f32 %v1030, %v1073
    %1075 = vmatmul.f32.gmra.mxu0 %v1022
    %v1076 = vpop.f32.mrf.mxu0
    %v1077 = vadd.f32 %v1030, %v1076
    %1078 = vmatmul.f32.gmra.mxu0 %v1023
    %v1079 = vpop.f32.mrf.mxu0
    %v1080 = vadd.f32 %v1030, %v1079
    %1081 = vmatmul.f32.gmra.mxu0 %v1024
    %v1082 = vpop.f32.mrf.mxu0
    %v1083 = vadd.f32 %v1030, %v1082
    %1084 = vmatmul.f32.gmra.mxu0 %v1025
    %v1085 = vpop.f32.mrf.mxu0
    %v1086 = vadd.f32 %v1030, %v1085
    %1087 = vmatmul.f32.gmra.mxu0 %v1026
    %v1088 = vpop.f32.mrf.mxu0
    %v1089 = vadd.f32 %v1030, %v1088
    %1090 = vmatmul.f32.gmra.mxu0 %v1027
    %v1091 = vpop.f32.mrf.mxu0
    %v1092 = vadd.f32 %v1030, %v1091
    %1093 = vmatmul.f32.gmra.mxu0 %v1028
    %v1094 = vpop.f32.mrf.mxu0
    %v1095 = vadd.f32 %v1030, %v1094
    %1096 = vdwg.mxu0
    %v1097 = vmax.f32 %v1050, 0.0
    %v1098 = vmax.f32 %v1053, 0.0
    %v1099 = vmax.f32 %v1056, 0.0
    %v1100 = vmax.f32 %v1059, 0.0
    %v1101 = vmax.f32 %v1062, 0.0
    %v1102 = vmax.f32 %v1065, 0.0
    %v1103 = vmax.f32 %v1068, 0.0
    %v1104 = vmax.f32 %v1071, 0.0
    %v1105 = vmax.f32 %v1074, 0.0
    %v1106 = vmax.f32 %v1077, 0.0
    %v1107 = vmax.f32 %v1080, 0.0
    %v1108 = vmax.f32 %v1083, 0.0
    %v1109 = vmax.f32 %v1086, 0.0
    %v1110 = vmax.f32 %v1089, 0.0
    %v1111 = vmax.f32 %v1092, 0.0
    %v1112 = vmax.f32 %v1095, 0.0
    %1113 = vmatpush.msra.mxu0 %v1112
    %1114 = vmatpush.msra.mxu0 %v1111
    %1115 = vmatpush.msra.mxu0 %v1110
    %1116 = vmatpush.msra.mxu0 %v1109
    %1117 = vmatpush.msra.mxu0 %v1108
    %1118 = vmatpush.msra.mxu0 %v1107
    %1119 = vmatpush.msra.mxu0 %v1106
    %1120 = vmatpush.msra.mxu0 %v1105
    %1121 = vmatpush.msra.mxu0 %v1104
    %1122 = vmatpush.msra.mxu0 %v1103
    %1123 = vmatpush.msra.mxu0 %v1102
    %1124 = vmatpush.msra.mxu0 %v1101
    %1125 = vmatpush.msra.mxu0 %v1100
    %1126 = vmatpush.msra.mxu0 %v1099
    %1127 = vmatpush.msra.mxu0 %v1098
    %1128 = vmatpush.msra.mxu0 %v1097
    %1129 = vmatmul.f32.gmra.mxu0 %v205
    %v1130 = vpop.f32.mrf.mxu0
    %v1131 = vadd.f32 0.0, %v1130
    %1132 = vdwg.mxu0
    %1133 = vst [vmem:[#allocation17 + $0x10] sm:$0xff] %v1131
    // Predicated region
    $region98: #{tpu_custom_call.1} parent=1 // pred_check
      _
    $region99: #{tpu_custom_call.1} parent=1 // pred_check_branch
      %1135 = sbr.rel (0) target = $region101
    $region100: #{tpu_custom_call.1} parent=1 // pred_region
      %1137 = vsyncadd [#allocation4], 0
      %s1139 = sshll.u32 [#allocation17], 4
      %s1140 = int_to_ptr.vmem [resolvable:$true] %s1139
      %s1141 = sshll.u32 %s15, 4
      %s1142 = int_to_ptr.hbm [resolvable:$true] %s1141
      %1144 = dma.vmem_to_hbm [thread:$0]  %s1140, 384, %s1142, [#allocation4]
    $region101: #{tpu_custom_call.1} parent=1 // pred_fallthru
      _
    // Predicated region
    $region102: #{tpu_custom_call.1} parent=1 // pred_check
      _
    $region103: #{tpu_custom_call.1} parent=1 // pred_check_branch
      %1146 = sbr.rel (0) target = $region105
    $region104: #{tpu_custom_call.1} parent=1 // pred_region
      %1148 = dma.done [#allocation4], 384
    $region105: #{tpu_custom_call.1} parent=1 // pred_fallthru
      _
    %1149 = vsyncpa [#allocation3], 1
    %1150 = vsyncpa [#allocation6], 1
    %1151 = vsyncpa [#allocation9], 1
    %1152 = vsyncpa [#allocation12], 1
    %1153 = vsyncpa [#allocation15], 1
    %1154 = vsyncpa [#allocation4], 1

</llo_original>
